<compile_context>
chip_gen: v7x
topology: tpu7x:2x2x1
jax: 0.10.0
libtpu: 0.0.40
codegen_flags: <defaults>
</compile_context>

<pallas_src>
import functools

import jax
import jax.numpy as jnp
from jax.experimental import pallas as pl
from jax.experimental.pallas import tpu as pltpu

_EPS = 1e-8


def _round_up(a, m):
    return ((a + m - 1) // m) * m


def _sublane_multiple(*dtypes):
    sub = 8
    for d in dtypes:
        sub = max(sub, 32 // max(jnp.dtype(d).itemsize, 1))
    return sub


def _choose_tile_rows(total_rows, width, sub, target_bytes=2 * 1024 * 1024):
    # ~2 MiB of f32 payload per block per stream; with 2-3 double-buffered
    # streams this stays well under the 32 MiB scoped-VMEM default.
    tile = target_bytes // (4 * max(width, 1))
    tile = max(sub, (tile // sub) * sub)
    tile = min(tile, _round_up(total_rows, sub))
    return max(sub, tile)


def _bce_terms(x, t, margin):
    # PyTorch BCEWithLogitsLoss(reduction='none'):
    #   bce(x, t)  = max(x,0) - x*t + log(1+exp(-|x|)) = softplus(x) - x*t
    #   bce(-x,-t) = softplus(-x) - x*t = bce(x, t) - x
    sp = jnp.maximum(x, 0.0) + jnp.log(1.0 + jnp.exp(-jnp.abs(x)))
    pos_loss = sp - x * t
    neg_loss = pos_loss - x
    pos_m = t > margin
    neg_m = t < -margin
    return pos_loss, neg_loss, pos_m, neg_m


def _class0_mask(shape, tile_rows, width, num_classes, flat):
    # Element belongs to class 0 iff its flat index (row-major over the
    # original (N, C) array) is a multiple of C.
    if flat:
        row = jax.lax.broadcasted_iota(jnp.int32, shape, 0)
        lane = jax.lax.broadcasted_iota(jnp.int32, shape, 1)
        flat_idx = (pl.program_id(0) * tile_rows + row) * width + lane
        return (flat_idx % num_classes) == 0
    # Non-flattened layout: width == C, class index == lane index.
    return jax.lax.broadcasted_iota(jnp.int32, shape, 1) == 0


def _loss_map_kernel(w_ref, x_ref, t_ref, o_ref, *, margin, num_classes, width,
                     flat, tile_rows):
    x = x_ref[...].astype(jnp.float32)
    t = t_ref[...].astype(jnp.float32)
    pos_loss, neg_loss, pos_m, neg_m = _bce_terms(x, t, margin)
    pos_part = pos_m.astype(jnp.float32) * pos_loss
    neg_part = neg_m.astype(jnp.float32) * neg_loss
    base = pos_part + neg_part                              # weight 1 everywhere
    weighted0 = w_ref[0] * pos_part + w_ref[1] * neg_part   # class-0 weights (SMEM)
    is_c0 = _class0_mask(x.shape, tile_rows, width, num_classes, flat)
    o_ref[...] = jnp.where(is_c0, weighted0, base).astype(o_ref.dtype)


def _loss_sum_kernel(x_ref, t_ref, part_ref, *, margin, num_classes, width,
                     flat, tile_rows, total_rows):
    x = x_ref[...].astype(jnp.float32)
    t = t_ref[...].astype(jnp.float32)
    pos_loss, neg_loss, pos_m, neg_m = _bce_terms(x, t, margin)
    is_c0 = _class0_mask(x.shape, tile_rows, width, num_classes, flat)

    if total_rows % tile_rows != 0:
        # Ragged last tile: the out-of-bounds rows of the input block contain
        # unspecified data; exclude them from every term via the masks.
        row = jax.lax.broadcasted_iota(jnp.int32, x.shape, 0)
        valid = (pl.program_id(0) * tile_rows + row) < total_rows
        pos_m = pos_m & valid
        neg_m = neg_m & valid

    one = jnp.ones_like(x)
    pos_part = jnp.where(pos_m, pos_loss, 0.0)
    neg_part = jnp.where(neg_m, neg_loss, 0.0)
    base = pos_part + neg_part

    def rsum(q):                       # row-axis only: pure VPU vreg adds
        return jnp.sum(q, axis=0, keepdims=True)            # (1, W)

    s_other = rsum(jnp.where(is_c0, 0.0, base))              # classes != 0, weight 1
    s_pos0 = rsum(jnp.where(is_c0, pos_part, 0.0))            # class-0 pos loss
    s_neg0 = rsum(jnp.where(is_c0, neg_part, 0.0))            # class-0 neg loss
    c_pos0 = rsum(jnp.where(is_c0 & pos_m, one, 0.0))         # class-0 pos count
    c_neg0 = rsum(jnp.where(is_c0 & neg_m, one, 0.0))         # class-0 neg count
    n_act = rsum(jnp.where(pos_m | neg_m, one, 0.0))          # active count
    zero = jnp.zeros_like(s_other)
    part_ref[...] = jnp.concatenate(
        [s_other, s_pos0, s_neg0, c_pos0, c_neg0, n_act, zero, zero], axis=0)


def partial_bce_loss(logits, target, margin=0.0, reduce=None, size_average=None,
                     tile_rows=None, out_dtype=jnp.float32):
    x = jnp.asarray(logits)        # keep native dtype (bf16 stays bf16 on the wire)
    t = jnp.asarray(target)
    assert x.ndim == 2 and x.shape == t.shape
    N, C = x.shape
    margin = float(margin)

    # Lane-dense layout: for C not a multiple of 128, view the elementwise
    # problem as (N*C/128, 128) -- a free row-major reshape.
    flat = (C % 128 != 0) and ((N * C) % 128 == 0) and (N * C < 2**31)
    if flat:
        W = 128
        R = (N * C) // 128
        x2 = x.reshape(R, W)
        t2 = t.reshape(R, W)
    else:
        W = C
        R = N
        x2, t2 = x, t

    sub = _sublane_multiple(x.dtype, t.dtype)
    if tile_rows is None:
        tile_rows = _choose_tile_rows(R, W, sub)
    else:
        tile_rows = max(sub, (int(tile_rows) // sub) * sub)
    num_tiles = pl.cdiv(R, tile_rows)

    row_spec = pl.BlockSpec((tile_rows, W), lambda i: (i, 0))
    cparams = pltpu.CompilerParams(
        dimension_semantics=("parallel",),        # dual-TC sharding on v7x
        vmem_limit_bytes=32 * 1024 * 1024,        # safe on v5e/v6e/v7x
    )

    if reduce:
        # Single streaming pass; class-0 counting folded into the kernel.
        partials = pl.pallas_call(
            functools.partial(
                _loss_sum_kernel, margin=margin, num_classes=C, width=W,
                flat=flat, tile_rows=tile_rows, total_rows=R),
            out_shape=jax.ShapeDtypeStruct((num_tiles, 8, W), jnp.float32),
            grid=(num_tiles,),
            in_specs=[row_spec, row_spec],
            out_specs=pl.BlockSpec((None, 8, W), lambda i: (i, 0, 0)),
            compiler_params=cparams,
        )(x2, t2)
        sums = jnp.sum(partials, axis=(0, 2))     # tiny (few-KiB) wrapper reduce
        s_other, s_pos0, s_neg0 = sums[0], sums[1], sums[2]
        c_pos0, c_neg0, n_act = sums[3], sums[4], sums[5]
        tot0 = c_pos0 + c_neg0 + _EPS
        total = s_other + (c_neg0 / tot0) * s_pos0 + (c_pos0 / tot0) * s_neg0
        if size_average:
            # mean over active entries; with no actives loss is all-zero -> 0
            return jnp.where(n_act > 0, total / jnp.maximum(n_act, 1.0), 0.0)
        return total

    # Elementwise map path: only global dependence is the class-0 weight pair,
    # computed from the class-0 column and handed to the kernel as SMEM scalars.
    t0 = t[:, 0].astype(jnp.float32)
    c_pos0 = jnp.sum((t0 > margin).astype(jnp.float32))
    c_neg0 = jnp.sum((t0 < -margin).astype(jnp.float32))
    tot0 = c_pos0 + c_neg0 + _EPS
    w01 = jnp.stack([c_neg0 / tot0, c_pos0 / tot0]).astype(jnp.float32)

    loss_map = pl.pallas_call(
        functools.partial(
            _loss_map_kernel, margin=margin, num_classes=C, width=W,
            flat=flat, tile_rows=tile_rows),
        out_shape=jax.ShapeDtypeStruct((R, W), out_dtype),
        grid=(num_tiles,),
        in_specs=[pl.BlockSpec(memory_space=pltpu.MemorySpace.SMEM),
                  row_spec, row_spec],
        out_specs=row_spec,
        compiler_params=cparams,
    )(w01, x2, t2)
    return loss_map.reshape(N, C)


def _reference(logits, target, margin=0.0, reduce=None, size_average=None):
    # Pure-JAX mirror of the PyTorch module (forward only).
    x = jnp.asarray(logits, jnp.float32)
    t = jnp.asarray(target, jnp.float32)
    pos_m = (t > margin).astype(jnp.float32)
    neg_m = (t < -margin).astype(jnp.float32)

    def bce(z, y):   # BCEWithLogitsLoss(reduction='none')
        return jnp.maximum(z, 0.0) - z * y + jnp.log(1.0 + jnp.exp(-jnp.abs(z)))

    pos_loss = bce(x, t)
    neg_loss = bce(-x, -t)
    pos_cnt = jnp.sum(pos_m, axis=0)
    neg_cnt = jnp.sum(neg_m, axis=0)
    tot = pos_cnt + neg_cnt + _EPS
    pw = jnp.ones_like(pos_cnt).at[0].set((neg_cnt / tot)[0])
    nw = jnp.ones_like(neg_cnt).at[0].set((pos_cnt / tot)[0])
    loss = pw * pos_m * pos_loss + nw * neg_m * neg_loss
    if reduce:
        active = (pos_m + neg_m) > 0
        n_active = jnp.sum(active)
        if size_average:
            return jnp.where(n_active > 0,
                             jnp.sum(loss) / jnp.maximum(n_active, 1),
                             jnp.mean(loss))
        return jnp.sum(loss)
    return loss


if __name__ == "__main__":
    key = jax.random.PRNGKey(0)
    k1, k2, k3, k4 = jax.random.split(key, 4)

    # Case 1: f32, C=32 (lane-dense flattened path); map, mean and sum.
    N, C = 16, 32
    logits = jax.random.normal(k1, (N, C), dtype=jnp.float32)
    # targets in {-1, 0, +1}; 0 = "unknown label" -> masked out
    target = jax.random.randint(k2, (N, C), minval=-1, maxval=2).astype(jnp.float32)

    out_map = jax.block_until_ready(partial_bce_loss(logits, target))
    ref_map = _reference(logits, target)
    assert out_map.shape == (N, C)
    assert jnp.allclose(out_map, ref_map, rtol=1e-5, atol=1e-6), (
        float(jnp.max(jnp.abs(out_map - ref_map))))

    out_mean = jax.block_until_ready(
        partial_bce_loss(logits, target, reduce=True, size_average=True))
    ref_mean = _reference(logits, target, reduce=True, size_average=True)
    assert jnp.allclose(out_mean, ref_mean, rtol=1e-5, atol=1e-5), (out_mean, ref_mean)

    out_sum = jax.block_until_ready(
        partial_bce_loss(logits, target, reduce=True, size_average=False))
    ref_sum = _reference(logits, target, reduce=True, size_average=False)
    assert jnp.allclose(out_sum, ref_sum, rtol=1e-5, atol=1e-4), (out_sum, ref_sum)

    # Case 2: C=7, N=10 -> non-flattenable fallback layout + ragged-tail mask.
    N2, C2 = 10, 7
    logits2 = jax.random.normal(k3, (N2, C2), dtype=jnp.float32)
    target2 = jax.random.randint(k4, (N2, C2), minval=-1, maxval=2).astype(jnp.float32)
    out2 = jax.block_until_ready(partial_bce_loss(logits2, target2))
    assert jnp.allclose(out2, _reference(logits2, target2), rtol=1e-5, atol=1e-6)
    out2m = jax.block_until_ready(
        partial_bce_loss(logits2, target2, reduce=True, size_average=True))
    ref2m = _reference(logits2, target2, reduce=True, size_average=True)
    assert jnp.allclose(out2m, ref2m, rtol=1e-5, atol=1e-5), (out2m, ref2m)

    # Case 3: bf16 inputs stay bf16 on the wire (halved HBM read traffic).
    N3, C3 = 32, 64
    logits3 = jax.random.normal(k1, (N3, C3), dtype=jnp.bfloat16)
    target3 = jax.random.randint(k2, (N3, C3), minval=-1, maxval=2).astype(jnp.bfloat16)
    out3 = jax.block_until_ready(
        partial_bce_loss(logits3, target3, reduce=True, size_average=True))
    ref3 = _reference(logits3.astype(jnp.float32), target3.astype(jnp.float32),
                      reduce=True, size_average=True)
    assert jnp.allclose(out3, ref3, rtol=1e-5, atol=1e-5), (out3, ref3)

    # Case 4: no active labels -> mean is exactly 0 (matches the module).
    zt = jnp.zeros((8, 16), jnp.float32)
    outz = jax.block_until_ready(
        partial_bce_loss(jax.random.normal(k3, (8, 16), dtype=jnp.float32), zt,
                         reduce=True, size_average=True))
    assert float(outz) == 0.0

    print("KERNEL_OK")
</pallas_src>

<mosaic_0001>
module attributes {stable_mosaic.version = 11 : i64} {
  func.func @_loss_map_kernel(%arg0: i32, %arg1: memref<2xf32, #tpu.memory_space<smem>>, %arg2: memref<8x128xf32, #tpu.memory_space<vmem>>, %arg3: memref<8x128xf32, #tpu.memory_space<vmem>>, %arg4: memref<8x128xf32, #tpu.memory_space<vmem>>) attributes {dimension_semantics = [#tpu.dimension_semantics<parallel>], iteration_bounds = array<i64: 1>, scalar_prefetch = 0 : i64, scratch_operands = 0 : i64, tpu.core_type = #tpu.core_type<tc>, window_params = [{transform_indices = @transform_0, window_bounds = array<i64: 2>}, {transform_indices = @transform_1, window_bounds = array<i64: 8, 128>}, {transform_indices = @transform_2, window_bounds = array<i64: 8, 128>}, {transform_indices = @transform_3, window_bounds = array<i64: 8, 128>}]} {
    %c0 = arith.constant 0 : index
    %c0_0 = arith.constant 0 : index
    %0 = vector.load %arg2[%c0, %c0_0] : memref<8x128xf32, #tpu.memory_space<vmem>>, vector<8x128xf32>
    %c0_1 = arith.constant 0 : index
    %c0_2 = arith.constant 0 : index
    %1 = vector.load %arg3[%c0_1, %c0_2] : memref<8x128xf32, #tpu.memory_space<vmem>>, vector<8x128xf32>
    %cst = arith.constant 0.000000e+00 : f32
    %2 = vector.broadcast %cst : f32 to vector<8x128xf32>
    %3 = arith.maximumf %0, %2 : vector<8x128xf32>
    %4 = math.absf %0 : vector<8x128xf32>
    %cst_3 = arith.constant 0.000000e+00 : f32
    %5 = vector.broadcast %cst_3 : f32 to vector<8x128xf32>
    %6 = arith.subf %5, %4 : vector<8x128xf32>
    %7 = math.exp %6 : vector<8x128xf32>
    %cst_4 = arith.constant 1.000000e+00 : f32
    %8 = vector.broadcast %cst_4 : f32 to vector<8x128xf32>
    %9 = arith.addf %8, %7 : vector<8x128xf32>
    %10 = math.log %9 : vector<8x128xf32>
    %11 = arith.addf %3, %10 : vector<8x128xf32>
    %12 = arith.mulf %0, %1 : vector<8x128xf32>
    %13 = arith.subf %11, %12 : vector<8x128xf32>
    %14 = arith.subf %13, %0 : vector<8x128xf32>
    %cst_5 = arith.constant 0.000000e+00 : f32
    %15 = vector.broadcast %cst_5 : f32 to vector<8x128xf32>
    %16 = arith.cmpf ogt, %1, %15 : vector<8x128xf32>
    %cst_6 = arith.constant -0.000000e+00 : f32
    %17 = vector.broadcast %cst_6 : f32 to vector<8x128xf32>
    %18 = arith.cmpf olt, %1, %17 : vector<8x128xf32>
    %19 = arith.extui %16 : vector<8x128xi1> to vector<8x128xi32>
    %20 = arith.sitofp %19 : vector<8x128xi32> to vector<8x128xf32>
    %21 = arith.mulf %20, %13 : vector<8x128xf32>
    %22 = arith.extui %18 : vector<8x128xi1> to vector<8x128xi32>
    %23 = arith.sitofp %22 : vector<8x128xi32> to vector<8x128xf32>
    %24 = arith.mulf %23, %14 : vector<8x128xf32>
    %25 = arith.addf %21, %24 : vector<8x128xf32>
    %c0_7 = arith.constant 0 : index
    %26 = memref.load %arg1[%c0_7] : memref<2xf32, #tpu.memory_space<smem>>
    %27 = vector.broadcast %26 : f32 to vector<8x128xf32>
    %28 = arith.mulf %27, %21 : vector<8x128xf32>
    %c1 = arith.constant 1 : index
    %29 = memref.load %arg1[%c1] : memref<2xf32, #tpu.memory_space<smem>>
    %30 = vector.broadcast %29 : f32 to vector<8x128xf32>
    %31 = arith.mulf %30, %24 : vector<8x128xf32>
    %32 = arith.addf %28, %31 : vector<8x128xf32>
    %33 = tpu.iota {dimensions = array<i32: 0>} : vector<8x128xi32>
    %34 = tpu.iota {dimensions = array<i32: 1>} : vector<8x128xi32>
    %c8_i32 = arith.constant 8 : i32
    %35 = arith.muli %arg0, %c8_i32 : i32
    %36 = vector.broadcast %35 : i32 to vector<8x128xi32>
    %37 = arith.addi %36, %33 : vector<8x128xi32>
    %c128_i32 = arith.constant 128 : i32
    %38 = vector.broadcast %c128_i32 : i32 to vector<8x128xi32>
    %39 = arith.muli %37, %38 : vector<8x128xi32>
    %40 = arith.addi %39, %34 : vector<8x128xi32>
    %c32_i32 = arith.constant 32 : i32
    %c0_i32 = arith.constant 0 : i32
    %41 = arith.cmpi eq, %c32_i32, %c0_i32 : i32
    %c1_i32 = arith.constant 1 : i32
    %42 = arith.select %41, %c1_i32, %c32_i32 : i32
    %43 = vector.broadcast %42 : i32 to vector<8x128xi32>
    %44 = arith.remsi %40, %43 : vector<8x128xi32>
    %c0_i32_8 = arith.constant 0 : i32
    %45 = vector.broadcast %c0_i32_8 : i32 to vector<8x128xi32>
    %46 = arith.cmpi ne, %44, %45 : vector<8x128xi32>
    %c0_i32_9 = arith.constant 0 : i32
    %47 = vector.broadcast %c0_i32_9 : i32 to vector<8x128xi32>
    %48 = arith.cmpi slt, %44, %47 : vector<8x128xi32>
    %c0_i32_10 = arith.constant 0 : i32
    %49 = arith.cmpi slt, %42, %c0_i32_10 : i32
    %50 = vector.broadcast %49 : i1 to vector<8x128xi1>
    %51 = vector.broadcast %50 : vector<8x128xi1> to vector<8x128xi1>
    %52 = arith.xori %48, %51 : vector<8x128xi1>
    %53 = arith.andi %52, %46 : vector<8x128xi1>
    %54 = vector.broadcast %42 : i32 to vector<8x128xi32>
    %55 = arith.addi %44, %54 : vector<8x128xi32>
    %56 = arith.select %53, %55, %44 : vector<8x128xi1>, vector<8x128xi32>
    %c0_i32_11 = arith.constant 0 : i32
    %57 = vector.broadcast %c0_i32_11 : i32 to vector<8x128xi32>
    %58 = arith.cmpi eq, %56, %57 : vector<8x128xi32>
    %59 = arith.select %58, %32, %25 : vector<8x128xi1>, vector<8x128xf32>
    %c0_12 = arith.constant 0 : index
    %c0_13 = arith.constant 0 : index
    %60 = vector.load %arg4[%c0_12, %c0_13] : memref<8x128xf32, #tpu.memory_space<vmem>>, vector<8x128xf32>
    tpu.vector_store %arg4[%c0_12, %c0_13], %59 {strides = array<i32>} : memref<8x128xf32, #tpu.memory_space<vmem>>, vector<8x128xf32>,
    return
  }
  func.func @transform_0(%arg0: i32) -> i32 {
    %c0_i32 = arith.constant 0 : i32
    %c0_i32_0 = arith.constant 0 : i32
    return %c0_i32 : i32
  }
  func.func @transform_1(%arg0: i32) -> (i32, i32) {
    %c0_i32 = arith.constant 0 : i32
    %c0_i32_0 = arith.constant 0 : i32
    return %arg0, %c0_i32 : i32, i32
  }
  func.func @transform_2(%arg0: i32) -> (i32, i32) {
    %c0_i32 = arith.constant 0 : i32
    %c0_i32_0 = arith.constant 0 : i32
    return %arg0, %c0_i32 : i32, i32
  }
  func.func @transform_3(%arg0: i32) -> (i32, i32) {
    %c0_i32 = arith.constant 0 : i32
    %c0_i32_0 = arith.constant 0 : i32
    return %arg0, %c0_i32 : i32, i32
  }
}

</mosaic_0001>

<llo_original>
// kernel: tpu_custom_call.1
$region0: #{tpu_custom_call.1}
  #allocation0 [shape = 'u32[]', space=smem, size = 0x4, offset = 0x4, fixed_abs, tag = 'smem constant byte address 0x4 - core index']
  #allocation1 [shape = 'u32[144,128]{1,0:T(1,128)}', space=vmem, size = 0x12000, scoped, tag = 'internal scratch']
  %s0 = inlined_call_operand.hbm [shape: f32[2], index: 0, kind: input, shape index: {}]
  %s1 = inlined_call_operand.hbm [shape: f32[4,128], index: 1, kind: input, shape index: {}]
  %s2 = inlined_call_operand.vmem [shape: f32[4,128], index: 2, kind: input, shape index: {}]
  %s3 = inlined_call_operand.hbm [shape: f32[4,128], index: 3, kind: output, shape index: {}]
  %s4 = sld [smem:[#allocation0]]
  $region30: #{tpu_custom_call.1} parent=0
    _
  %s6 = ssub.s32 1, %s4
  %s7 = scalar_select 0, %s6, %s4
  $region1: #{tpu_custom_call.1} parent=0
    #allocation2 [shape = 'u8[512]{0}', space=smem, size = 0x200, scoped, tag = 'input window, operand 0, single buffered']
    #allocation3 [shape = 's32[1]{0}', space=sflag, size = 0x4, scoped, tag = 'scoped memory for tpu_custom_call.1']
    #allocation4 [shape = 's32[1]{0}', space=sflag, size = 0x4, scoped, tag = 'scoped memory for tpu_custom_call.1']
    #allocation5 [shape = 's32[1]{0}', space=sflag, size = 0x4, scoped, tag = 'scoped memory for tpu_custom_call.1']
    #allocation6 [shape = 'u8[4096]{0}', space=vmem, size = 0x1000, scoped, tag = 'input window, operand 1, single buffered']
    #allocation7 [shape = 'u8[4096]{0}', space=vmem, size = 0x1000, scoped, tag = 'output window, operand 0, single buffered']
    %8 = vsyncpa [#allocation5], 0
    %9 = vsyncpa [#allocation3], 0
    %10 = vsyncpa [#allocation4], 0
    // Predicated region
    $region2: #{tpu_custom_call.1} parent=1 // pred_check
      _
    $region3: #{tpu_custom_call.1} parent=1 // pred_check_branch
      %12 = sbr.rel (0) target = $region5
    $region4: #{tpu_custom_call.1} parent=1 // pred_region
      %s14 = ssub.s32 16, 16
      %15 = vsyncadd [#allocation5], %s14
      %18 = dma.hbm_to_smem %s0, 16, [#allocation2], [#allocation5]
    $region5: #{tpu_custom_call.1} parent=1 // pred_fallthru
      _
    // Predicated region
    $region6: #{tpu_custom_call.1} parent=1 // pred_check
      _
    $region7: #{tpu_custom_call.1} parent=1 // pred_check_branch
      %20 = sbr.rel (0) target = $region9
    $region8: #{tpu_custom_call.1} parent=1 // pred_region
      %s22 = ssub.s32 128, 64
      %23 = vsyncadd [#allocation3], %s22
      %s24 = sshll.u32 [#allocation6], 4
      %s25 = int_to_ptr.vmem [resolvable:$true] %s24
      %30 = dma.hbm_to_vmem [thread:$0]  %s1, 64, %s25, [#allocation3], 64, 64, 4
    $region9: #{tpu_custom_call.1} parent=1 // pred_fallthru
      _
    // Predicated region
    $region10: #{tpu_custom_call.1} parent=1 // pred_check
      _
    $region11: #{tpu_custom_call.1} parent=1 // pred_check_branch
      %32 = sbr.rel (0) target = $region13
    $region12: #{tpu_custom_call.1} parent=1 // pred_region
      _
    $region13: #{tpu_custom_call.1} parent=1 // pred_fallthru
      _
    // Predicated region
    $region14: #{tpu_custom_call.1} parent=1 // pred_check
      _
    $region15: #{tpu_custom_call.1} parent=1 // pred_check_branch
      %34 = sbr.rel (0) target = $region17
    $region16: #{tpu_custom_call.1} parent=1 // pred_region
      %35 = dma.done [#allocation5], 16
    $region17: #{tpu_custom_call.1} parent=1 // pred_fallthru
      _
    // Predicated region
    $region18: #{tpu_custom_call.1} parent=1 // pred_check
      _
    $region19: #{tpu_custom_call.1} parent=1 // pred_check_branch
      %37 = sbr.rel (0) target = $region21
    $region20: #{tpu_custom_call.1} parent=1 // pred_region
      %38 = dma.done [#allocation3], 128
    $region21: #{tpu_custom_call.1} parent=1 // pred_fallthru
      _
    %39 = sfence
    %v40 = vld [vmem:[#allocation6] sm:$0xff]
    %v41 = vld [vmem:[%s2] sm:$0xff]
    %v42 = vmax.f32 %v40, 0.0
    %v43 = vand.u32 2147483647, %v40
    %v44 = vsub.f32 0.0, %v43
    %v45 = vmul.f32 %v44, 1.442695
    %v46 = vpow.pop %v45
    %v47 = vadd.f32 %v46, 1.0
    %v48 = vlog2.pop %v47
    %v49 = vmul.f32 %v48, 0.6931472
    %v50 = vadd.f32 %v42, %v49
    %v51 = vmul.f32 %v40, %v41
    %v52 = vsub.f32 %v50, %v51
    %v53 = vsub.f32 %v52, %v40
    %vm54 = vcmp.gt.f32.partialorder %v41, 0.0
    %vm55 = vcmp.lt.f32.partialorder %v41, -0.0
    %v56 = vsel %vm54, 1, 0
    %v57 = vcvt.s32.f32 %v56
    %v58 = vmul.f32 %v57, %v52
    %v59 = vsel %vm55, 1, 0
    %v60 = vcvt.s32.f32 %v59
    %v61 = vmul.f32 %v60, %v53
    %v62 = vadd.f32 %v58, %v61
    %s63 = sld [smem:[#allocation2]]
    %v64 = vstv %s63
    %v65 = vmul.f32 %v64, %v58
    %s66 = sld [smem:[#allocation2 + $0x1]]
    %v67 = vstv %s66
    %v68 = vmul.f32 %v67, %v61
    %v69 = vadd.f32 %v65, %v68
    %v70 = vlaneseq
    %v71 = vshrl.u32 %v70, 7
    %v72 = vlaneseq
    %v73 = vand.u32 %v72, 127
    %s74 = smul.u32 0, 8
    %v75 = vstv %s74
    %v76 = vadd.s32 %v75, %v71
    %v77 = vmul.u32 %v76, 128
    %v78 = vadd.s32 %v77, %v73
    %vm79 = vcmp.lt.s32.totalorder %v78, 0
    %v80 = vsub.s32 0, %v78
    %v81 = vsel %vm79, %v80, %v78
    %v82 = vshrl.u32 %v81, 5
    %v83 = vand.u32 %v81, 31
    %v84 = vsub.s32 0, %v83
    %v85 = vsel %vm79, %v84, %v83
    %vm86 = vcmp.ne.s32.totalorder %v85, 0
    %vm87 = vcmp.lt.s32.totalorder %v85, 0
    %vm88 = vmand %vm87, %vm86
    %v89 = vadd.s32 %v85, 32
    %v90 = vsel %vm88, %v89, %v85
    %vm91 = vcmp.eq.s32.totalorder %v90, 0
    %v92 = vsel %vm91, %v69, %v62
    %93 = vst [vmem:[#allocation7] sm:$0xff] %v92
    // Predicated region
    $region22: #{tpu_custom_call.1} parent=1 // pred_check
      _
    $region23: #{tpu_custom_call.1} parent=1 // pred_check_branch
      %95 = sbr.rel (0) target = $region25
    $region24: #{tpu_custom_call.1} parent=1 // pred_region
      %s97 = ssub.s32 128, 64
      %98 = vsyncadd [#allocation4], %s97
      %s99 = sshll.u32 [#allocation7], 4
      %s100 = int_to_ptr.vmem [resolvable:$true] %s99
      %105 = dma.vmem_to_hbm [thread:$0]  %s100, 64, %s3, [#allocation4], 64, 64, 4
    $region25: #{tpu_custom_call.1} parent=1 // pred_fallthru
      _
    // Predicated region
    $region26: #{tpu_custom_call.1} parent=1 // pred_check
      _
    $region27: #{tpu_custom_call.1} parent=1 // pred_check_branch
      %107 = sbr.rel (0) target = $region29
    $region28: #{tpu_custom_call.1} parent=1 // pred_region
      %108 = dma.done [#allocation4], 128
    $region29: #{tpu_custom_call.1} parent=1 // pred_fallthru
      _
    %109 = vsyncpa [#allocation3], 1
    %110 = vsyncpa [#allocation4], 1
    %111 = vsyncpa [#allocation5], 1

</llo_original>
